<compile_context>
chip_gen: v7x
topology: tpu7x:2x2x1
jax: 0.10.0
libtpu: 0.0.40
codegen_flags: <defaults>
</compile_context>

<pallas_src>
import functools

import jax
import jax.numpy as jnp
import numpy as np
from jax.experimental import pallas as pl
from jax.experimental.pallas import tpu as pltpu


def _round_up(a: int, b: int) -> int:
    return ((a + b - 1) // b) * b


def _vq_kernel(x_ref, emb_ref, en_ref, xq_ref, idx_ref, *, K: int):
    x = x_ref[...]            # (tile_n, D)  input rows
    e_n = en_ref[...]         # (K, D)       pre-normalized codebook
    emb = emb_ref[...]        # (K, D)       raw codebook (used for the gather)

    # Similarity, transposed so codes run along sublanes and rows along lanes:
    #   s[k, n] = sum_d e_n[k, d] * x[n, d]          -> (K, tile_n)
    # argmax_k s[k, n] == argmin_k (1 - cos(x[n], emb[k])) / tau
    s = jax.lax.dot_general(
        e_n, x, (((1,), (1,)), ((), ())),
        preferred_element_type=jnp.float32)

    # First-occurrence argmax over the code (sublane) axis, matching
    # torch.argmin tie-breaking.
    max_s = jnp.max(s, axis=0, keepdims=True)                       # (1, tile_n)
    row = jax.lax.broadcasted_iota(jnp.int32, s.shape, 0)           # code index k
    idx = jnp.min(jnp.where(s >= max_s, row, K), axis=0, keepdims=True)
    idx_ref[...] = idx                                              # lane-dense (1, tile_n)

    # Gather codebook rows via one-hot matmul on the RAW embedding.
    onehot = (row == idx).astype(emb.dtype)                         # (K, tile_n)
    xq = jax.lax.dot_general(
        onehot, emb, (((0,), (0,)), ((), ())),
        preferred_element_type=jnp.float32)                         # (tile_n, D)

    # Straight-through value: x + (x_q - x), fused here (no extra HBM pass).
    x_f32 = x.astype(jnp.float32)
    xq_ref[...] = (x_f32 + (xq - x_f32)).astype(xq_ref.dtype)


def ema_vector_quantizer_forward(x, embedding, *, tau=0.2, tile_n=1024):
    """Eval-mode forward of EMAVectorQuantizer (dist='cos').

    Returns (x_q, loss, indices), matching the PyTorch module. `tau` does not
    affect the argmin (positive-scale / monotone-affine invariance) and so is
    unused in the kernel; it is kept for API parity.
    """
    del tau  # argmin((1 - cos)/tau) is invariant to tau > 0.
    K, D = embedding.shape
    orig_shape = x.shape
    latent = x.reshape(-1, D)
    N = latent.shape[0]

    # Grid-invariant codebook normalization, hoisted out of the kernel.
    # F.normalize(..., dim=-1): v / max(||v||_2, 1e-12)
    emb_f32 = embedding.astype(jnp.float32)
    e_norm = jnp.sqrt(jnp.sum(emb_f32 ** 2, axis=-1, keepdims=True))
    e_n = (emb_f32 / jnp.maximum(e_norm, 1e-12)).astype(embedding.dtype)

    # Tile sizing: large row tiles, clamped for tiny inputs, padded otherwise.
    tile_n = min(int(tile_n), _round_up(N, 8))
    tile_n = max(8, _round_up(tile_n, 8))
    num_tiles = pl.cdiv(N, tile_n)
    n_pad = num_tiles * tile_n
    latent_p = jnp.pad(latent, ((0, n_pad - N), (0, 0))) if n_pad != N else latent

    xq_flat, idx_flat = pl.pallas_call(
        functools.partial(_vq_kernel, K=int(K)),
        out_shape=(
            jax.ShapeDtypeStruct((n_pad, D), x.dtype),
            jax.ShapeDtypeStruct((num_tiles, tile_n), jnp.int32),
        ),
        grid_spec=pltpu.PrefetchScalarGridSpec(
            num_scalar_prefetch=0,
            grid=(num_tiles,),
            in_specs=[
                pl.BlockSpec((tile_n, D), lambda i: (i, 0)),   # latent row tile
                pl.BlockSpec((K, D), lambda i: (0, 0)),        # raw codebook
                pl.BlockSpec((K, D), lambda i: (0, 0)),        # normalized codebook
            ],
            out_specs=[
                pl.BlockSpec((tile_n, D), lambda i: (i, 0)),   # quantized rows
                pl.BlockSpec((1, tile_n), lambda i: (i, 0)),   # lane-dense indices
            ],
        ),
        compiler_params=pltpu.CompilerParams(
            dimension_semantics=("parallel",)),
    )(latent_p, embedding, e_n)

    x_q = xq_flat[:N].reshape(orig_shape)
    indices = idx_flat.reshape(-1)[:N].reshape(orig_shape[:-1])
    loss = jnp.zeros((1,), dtype=jnp.float32)
    return x_q, loss, indices


def _reference_forward(x, embedding, tau=0.2):
    """Pure-JAX transcription of the PyTorch eval-mode forward (dist='cos')."""
    D = embedding.shape[1]
    latent = x.reshape(-1, D)
    x_n = latent / jnp.maximum(
        jnp.linalg.norm(latent, axis=-1, keepdims=True), 1e-12)
    e_n = embedding / jnp.maximum(
        jnp.linalg.norm(embedding, axis=-1, keepdims=True), 1e-12)
    d = (1.0 - x_n @ e_n.T) / tau
    idx = jnp.argmin(d, axis=-1)
    x_q = embedding[idx].reshape(x.shape)
    x_q = x + jax.lax.stop_gradient(x_q - x)   # STE value: x + (x_q - x)
    return x_q, idx.reshape(x.shape[:-1])


if __name__ == "__main__":
    codebook_size = 64   # K
    codebook_dim = 32    # D

    key = jax.random.PRNGKey(0)
    kx, ke, kx2 = jax.random.split(key, 3)
    embedding = jax.random.normal(ke, (codebook_size, codebook_dim),
                                  dtype=jnp.float32)

    # Case 1: small (B, S, D) input -> single clamped tile.
    B, S = 2, 8
    x = jax.random.normal(kx, (B, S, codebook_dim), dtype=jnp.float32)
    x_q, loss, indices = ema_vector_quantizer_forward(x, embedding, tau=0.2)
    jax.block_until_ready((x_q, loss, indices))

    ref_xq, ref_idx = _reference_forward(x, embedding, tau=0.2)
    assert np.array_equal(np.asarray(indices), np.asarray(ref_idx))
    assert np.allclose(np.asarray(x_q), np.asarray(ref_xq), atol=1e-5)
    assert loss.shape == (1,) and float(loss[0]) == 0.0

    # Case 2: N not a multiple of the tile -> exercises padding + multi-tile grid.
    x2 = jax.random.normal(kx2, (3, 100, codebook_dim), dtype=jnp.float32)
    x_q2, loss2, indices2 = ema_vector_quantizer_forward(
        x2, embedding, tau=0.2, tile_n=128)
    jax.block_until_ready((x_q2, loss2, indices2))

    ref_xq2, ref_idx2 = _reference_forward(x2, embedding, tau=0.2)
    assert np.array_equal(np.asarray(indices2), np.asarray(ref_idx2))
    assert np.allclose(np.asarray(x_q2), np.asarray(ref_xq2), atol=1e-5)

    print("KERNEL_OK")
</pallas_src>

<mosaic_0001>
module attributes {stable_mosaic.version = 11 : i64} {
  func.func @_vq_kernel(%arg0: i32, %arg1: memref<16x32xf32, #tpu.memory_space<vmem>>, %arg2: memref<64x32xf32, #tpu.memory_space<vmem>>, %arg3: memref<64x32xf32, #tpu.memory_space<vmem>>, %arg4: memref<16x32xf32, #tpu.memory_space<vmem>>, %arg5: memref<1x16xi32, #tpu.memory_space<vmem>>) attributes {dimension_semantics = [#tpu.dimension_semantics<parallel>], iteration_bounds = array<i64: 1>, scalar_prefetch = 0 : i64, scratch_operands = 0 : i64, tpu.core_type = #tpu.core_type<tc>, window_params = [{transform_indices = @transform_0, window_bounds = array<i64: 16, 32>}, {pipeline_mode = #tpu.pipeline_mode<synchronous>, transform_indices = @transform_1, window_bounds = array<i64: 64, 32>}, {pipeline_mode = #tpu.pipeline_mode<synchronous>, transform_indices = @transform_2, window_bounds = array<i64: 64, 32>}, {transform_indices = @transform_3, window_bounds = array<i64: 16, 32>}, {transform_indices = @transform_4, window_bounds = array<i64: 1, 16>}]} {
    %c0 = arith.constant 0 : index
    %c0_0 = arith.constant 0 : index
    %0 = vector.load %arg1[%c0, %c0_0] : memref<16x32xf32, #tpu.memory_space<vmem>>, vector<16x32xf32>
    %c0_1 = arith.constant 0 : index
    %c0_2 = arith.constant 0 : index
    %1 = vector.load %arg3[%c0_1, %c0_2] : memref<64x32xf32, #tpu.memory_space<vmem>>, vector<64x32xf32>
    %c0_3 = arith.constant 0 : index
    %c0_4 = arith.constant 0 : index
    %2 = vector.load %arg2[%c0_3, %c0_4] : memref<64x32xf32, #tpu.memory_space<vmem>>, vector<64x32xf32>
    %cst = arith.constant dense<0.000000e+00> : vector<64x16xf32>
    %3 = tpu.matmul %1, %0, %cst {dimension_numbers = #tpu.dot_dimension_numbers<[1], [1], [0], [0], [0, 0, 1, 0], [], []>} : vector<64x32xf32>, vector<16x32xf32>, vector<64x16xf32> -> vector<64x16xf32>
    %cst_5 = arith.constant dense<0xFF800000> : vector<16xf32>
    %4 = vector.multi_reduction <maximumf>, %3, %cst_5 [0] : vector<64x16xf32> to vector<16xf32>
    %5 = vector.shape_cast %4 : vector<16xf32> to vector<1x16xf32>
    %6 = tpu.iota {dimensions = array<i32: 0>} : vector<64x16xi32>
    %7 = vector.broadcast %5 : vector<1x16xf32> to vector<64x16xf32>
    %8 = arith.cmpf oge, %3, %7 : vector<64x16xf32>
    %c64_i32 = arith.constant 64 : i32
    %9 = vector.broadcast %c64_i32 : i32 to vector<64x16xi32>
    %10 = arith.select %8, %6, %9 : vector<64x16xi1>, vector<64x16xi32>
    %cst_6 = arith.constant dense<2147483647> : vector<16xi32>
    %11 = vector.multi_reduction <minsi>, %10, %cst_6 [0] : vector<64x16xi32> to vector<16xi32>
    %12 = vector.shape_cast %11 : vector<16xi32> to vector<1x16xi32>
    %c0_7 = arith.constant 0 : index
    %c0_8 = arith.constant 0 : index
    %13 = vector.load %arg5[%c0_7, %c0_8] : memref<1x16xi32, #tpu.memory_space<vmem>>, vector<1x16xi32>
    tpu.vector_store %arg5[%c0_7, %c0_8], %12 {strides = array<i32>} : memref<1x16xi32, #tpu.memory_space<vmem>>, vector<1x16xi32>,
    %14 = vector.broadcast %12 : vector<1x16xi32> to vector<64x16xi32>
    %15 = arith.cmpi eq, %6, %14 : vector<64x16xi32>
    %16 = arith.extui %15 : vector<64x16xi1> to vector<64x16xi32>
    %17 = arith.sitofp %16 : vector<64x16xi32> to vector<64x16xf32>
    %cst_9 = arith.constant dense<0.000000e+00> : vector<16x32xf32>
    %18 = tpu.matmul %17, %2, %cst_9 {dimension_numbers = #tpu.dot_dimension_numbers<[0], [0], [1], [1], [0, 1, 1, 1], [], []>} : vector<64x16xf32>, vector<64x32xf32>, vector<16x32xf32> -> vector<16x32xf32>
    %19 = arith.subf %18, %0 : vector<16x32xf32>
    %20 = arith.addf %0, %19 : vector<16x32xf32>
    %c0_10 = arith.constant 0 : index
    %c0_11 = arith.constant 0 : index
    %21 = vector.load %arg4[%c0_10, %c0_11] : memref<16x32xf32, #tpu.memory_space<vmem>>, vector<16x32xf32>
    tpu.vector_store %arg4[%c0_10, %c0_11], %20 {strides = array<i32>} : memref<16x32xf32, #tpu.memory_space<vmem>>, vector<16x32xf32>,
    return
  }
  func.func @transform_0(%arg0: i32) -> (i32, i32) {
    %c0_i32 = arith.constant 0 : i32
    %c0_i32_0 = arith.constant 0 : i32
    return %arg0, %c0_i32 : i32, i32
  }
  func.func @transform_1(%arg0: i32) -> (i32, i32) {
    %c0_i32 = arith.constant 0 : i32
    %c0_i32_0 = arith.constant 0 : i32
    %c0_i32_1 = arith.constant 0 : i32
    return %c0_i32, %c0_i32_0 : i32, i32
  }
  func.func @transform_2(%arg0: i32) -> (i32, i32) {
    %c0_i32 = arith.constant 0 : i32
    %c0_i32_0 = arith.constant 0 : i32
    %c0_i32_1 = arith.constant 0 : i32
    return %c0_i32, %c0_i32_0 : i32, i32
  }
  func.func @transform_3(%arg0: i32) -> (i32, i32) {
    %c0_i32 = arith.constant 0 : i32
    %c0_i32_0 = arith.constant 0 : i32
    return %arg0, %c0_i32 : i32, i32
  }
  func.func @transform_4(%arg0: i32) -> (i32, i32) {
    %c0_i32 = arith.constant 0 : i32
    %c0_i32_0 = arith.constant 0 : i32
    return %arg0, %c0_i32 : i32, i32
  }
}

</mosaic_0001>

<llo_original>
// kernel: tpu_custom_call.1
$region0: #{tpu_custom_call.1}
  #allocation0 [shape = 'u32[]', space=smem, size = 0x4, offset = 0x4, fixed_abs, tag = 'smem constant byte address 0x4 - core index']
  #allocation1 [shape = 'u32[144,128]{1,0:T(1,128)}', space=vmem, size = 0x12000, scoped, tag = 'internal scratch']
  %s0 = inlined_call_operand.vmem [shape: f32[16,32], index: 0, kind: input, shape index: {}]
  %s1 = inlined_call_operand.vmem [shape: f32[64,32], index: 1, kind: input, shape index: {}]
  %s2 = inlined_call_operand.vmem [shape: f32[64,32], index: 2, kind: input, shape index: {}]
  %s3 = inlined_call_operand.hbm [shape: f32[16,32], index: 3, kind: output, shape index: {0}]
  %s4 = inlined_call_operand.hbm [shape: s32[1,16], index: 4, kind: output, shape index: {1}]
  %5 = xla_tuple %s3, %s4
  %s6 = sld [smem:[#allocation0]]
  $region30: #{tpu_custom_call.1} parent=0
    _
  %s8 = ssub.s32 1, %s6
  %s9 = scalar_select 0, %s8, %s6
  $region1: #{tpu_custom_call.1} parent=0
    #allocation2 [shape = 'u8[8192]{0}', space=vmem, size = 0x2000, scoped, tag = 'output window, operand 0, single buffered']
    #allocation3 [shape = 's32[1]{0}', space=sflag, size = 0x4, scoped, tag = 'scoped memory for tpu_custom_call.1']
    #allocation4 [shape = 'u8[512]{0}', space=vmem, size = 0x400, scoped, tag = 'output window, operand 1, single buffered']
    #allocation5 [shape = 's32[1]{0}', space=sflag, size = 0x4, scoped, tag = 'scoped memory for tpu_custom_call.1']
    %10 = vsyncpa [#allocation3], 0
    %11 = vsyncpa [#allocation5], 0
    // Predicated region
    $region2: #{tpu_custom_call.1} parent=1 // pred_check
      _
    $region3: #{tpu_custom_call.1} parent=1 // pred_check_branch
      %13 = sbr.rel (0) target = $region5
    $region4: #{tpu_custom_call.1} parent=1 // pred_region
      _
    $region5: #{tpu_custom_call.1} parent=1 // pred_fallthru
      _
    // Predicated region
    $region6: #{tpu_custom_call.1} parent=1 // pred_check
      _
    $region7: #{tpu_custom_call.1} parent=1 // pred_check_branch
      %15 = sbr.rel (0) target = $region9
    $region8: #{tpu_custom_call.1} parent=1 // pred_region
      _
    $region9: #{tpu_custom_call.1} parent=1 // pred_fallthru
      _
    // Predicated region
    $region10: #{tpu_custom_call.1} parent=1 // pred_check
      _
    $region11: #{tpu_custom_call.1} parent=1 // pred_check_branch
      %17 = sbr.rel (0) target = $region13
    $region12: #{tpu_custom_call.1} parent=1 // pred_region
      _
    $region13: #{tpu_custom_call.1} parent=1 // pred_fallthru
      _
    %v18 = vld [vmem:[%s0] sm:$0xff]
    %v19 = vld [vmem:[%s0 + $0x8] sm:$0xff]
    %v20 = vld [vmem:[%s2] sm:$0xff]
    %v21 = vld [vmem:[%s2 + $0x8] sm:$0xff]
    %v22 = vld [vmem:[%s2 + $0x10] sm:$0xff]
    %v23 = vld [vmem:[%s2 + $0x18] sm:$0xff]
    %v24 = vld [vmem:[%s2 + $0x20] sm:$0xff]
    %v25 = vld [vmem:[%s2 + $0x28] sm:$0xff]
    %v26 = vld [vmem:[%s2 + $0x30] sm:$0xff]
    %v27 = vld [vmem:[%s2 + $0x38] sm:$0xff]
    %v28 = vld [vmem:[%s1] sm:$0xff]
    %v29 = vld [vmem:[%s1 + $0x8] sm:$0xff]
    %v30 = vld [vmem:[%s1 + $0x10] sm:$0xff]
    %v31 = vld [vmem:[%s1 + $0x18] sm:$0xff]
    %v32 = vld [vmem:[%s1 + $0x20] sm:$0xff]
    %v33 = vld [vmem:[%s1 + $0x28] sm:$0xff]
    %v34 = vld [vmem:[%s1 + $0x30] sm:$0xff]
    %v35 = vld [vmem:[%s1 + $0x38] sm:$0xff]
    %vm36 = vcmask 261120
    %v38 = vsel %vm36, %v20, 0
    %v41 = vsel %vm36, %v21, 0
    %v44 = vsel %vm36, %v22, 0
    %v47 = vsel %vm36, %v23, 0
    %v50 = vsel %vm36, %v24, 0
    %v53 = vsel %vm36, %v25, 0
    %v56 = vsel %vm36, %v26, 0
    %v59 = vsel %vm36, %v27, 0
    %v62 = vsel %vm36, %v18, 0
    %v65 = vsel %vm36, %v19, 0
    %67 = vmatprep.subr.mxu0 0.0
    %68 = vmatpush1.xpose.msra.mxu0 %v62
    %69 = vmatprep.subr.mxu0 0.0
    %70 = vmatpush1.xpose.msra.mxu0 %v65
    %71 = vmatprep.subr.mxu0 0.0
    %72 = vmatpush1.xpose.msra.mxu0 0.0
    %73 = vmatprep.subr.mxu0 0.0
    %74 = vmatpush1.xpose.msra.mxu0 0.0
    %75 = vmatprep.subr.mxu0 0.0
    %76 = vmatpush1.xpose.msra.mxu0 0.0
    %77 = vmatprep.subr.mxu0 0.0
    %78 = vmatpush1.xpose.msra.mxu0 0.0
    %79 = vmatprep.subr.mxu0 0.0
    %80 = vmatpush1.xpose.msra.mxu0 0.0
    %81 = vmatprep.subr.mxu0 0.0
    %82 = vmatpush1.xpose.msra.mxu0 0.0
    %83 = vmatprep.subr.mxu0 0.0
    %84 = vmatpush1.xpose.msra.mxu0 0.0
    %85 = vmatprep.subr.mxu0 0.0
    %86 = vmatpush1.xpose.msra.mxu0 0.0
    %87 = vmatprep.subr.mxu0 0.0
    %88 = vmatpush1.xpose.msra.mxu0 0.0
    %89 = vmatprep.subr.mxu0 0.0
    %90 = vmatpush1.xpose.msra.mxu0 0.0
    %91 = vmatprep.subr.mxu0 0.0
    %92 = vmatpush1.xpose.msra.mxu0 0.0
    %93 = vmatprep.subr.mxu0 0.0
    %94 = vmatpush1.xpose.msra.mxu0 0.0
    %95 = vmatprep.subr.mxu0 0.0
    %96 = vmatpush1.xpose.msra.mxu0 0.0
    %97 = vmatprep.subr.mxu0 0.0
    %98 = vmatpush1.xpose.msra.mxu0 0.0
    %99 = vmatprep.subr.mxu0 0.0
    %100 = vmatpush1.xpose.msra.mxu0 0.0
    %101 = vmatprep.subr.mxu0 0.0
    %102 = vmatpush1.xpose.msra.mxu0 0.0
    %103 = vmatprep.subr.mxu0 0.0
    %104 = vmatpush1.xpose.msra.mxu0 0.0
    %105 = vmatprep.subr.mxu0 0.0
    %106 = vmatpush1.xpose.msra.mxu0 0.0
    %107 = vmatprep.subr.mxu0 0.0
    %108 = vmatpush1.xpose.msra.mxu0 0.0
    %109 = vmatprep.subr.mxu0 0.0
    %110 = vmatpush1.xpose.msra.mxu0 0.0
    %111 = vmatprep.subr.mxu0 0.0
    %112 = vmatpush1.xpose.msra.mxu0 0.0
    %113 = vmatprep.subr.mxu0 0.0
    %114 = vmatpush1.xpose.msra.mxu0 0.0
    %115 = vmatprep.subr.mxu0 0.0
    %116 = vmatpush1.xpose.msra.mxu0 0.0
    %117 = vmatprep.subr.mxu0 0.0
    %118 = vmatpush1.xpose.msra.mxu0 0.0
    %119 = vmatprep.subr.mxu0 0.0
    %120 = vmatpush1.xpose.msra.mxu0 0.0
    %121 = vmatprep.subr.mxu0 0.0
    %122 = vmatpush1.xpose.msra.mxu0 0.0
    %123 = vmatprep.subr.mxu0 0.0
    %124 = vmatpush1.xpose.msra.mxu0 0.0
    %125 = vmatprep.subr.mxu0 0.0
    %126 = vmatpush1.xpose.msra.mxu0 0.0
    %127 = vmatprep.subr.mxu0 0.0
    %128 = vmatpush1.xpose.msra.mxu0 0.0
    %129 = vmatprep.subr.mxu0 0.0
    %130 = vmatpush1.xpose.msra.mxu0 0.0
    %131 = vmatprep.mubr.f32.mxu0 0.0
    %132 = vmatmul.mubr.f32.gmra.mrb[0].mxu0 %v38
    %v133 = vpop.f32.mrb[0].mxu0
    %v134 = vadd.f32 0.0, %v133
    %v135 = vpop.f32.mrb[0].mxu0
    %136 = vmatprep.mubr.f32.mxu0 0.0
    %137 = vmatmul.mubr.f32.gmra.mrb[0].mxu0 %v41
    %v138 = vpop.f32.mrb[0].mxu0
    %v139 = vadd.f32 0.0, %v138
    %v140 = vpop.f32.mrb[0].mxu0
    %141 = vmatprep.mubr.f32.mxu0 0.0
    %142 = vmatmul.mubr.f32.gmra.mrb[0].mxu0 %v44
    %v143 = vpop.f32.mrb[0].mxu0
    %v144 = vadd.f32 0.0, %v143
    %v145 = vpop.f32.mrb[0].mxu0
    %146 = vmatprep.mubr.f32.mxu0 0.0
    %147 = vmatmul.mubr.f32.gmra.mrb[0].mxu0 %v47
    %v148 = vpop.f32.mrb[0].mxu0
    %v149 = vadd.f32 0.0, %v148
    %v150 = vpop.f32.mrb[0].mxu0
    %151 = vmatprep.mubr.f32.mxu0 0.0
    %152 = vmatmul.mubr.f32.gmra.mrb[0].mxu0 %v50
    %v153 = vpop.f32.mrb[0].mxu0
    %v154 = vadd.f32 0.0, %v153
    %v155 = vpop.f32.mrb[0].mxu0
    %156 = vmatprep.mubr.f32.mxu0 0.0
    %157 = vmatmul.mubr.f32.gmra.mrb[0].mxu0 %v53
    %v158 = vpop.f32.mrb[0].mxu0
    %v159 = vadd.f32 0.0, %v158
    %v160 = vpop.f32.mrb[0].mxu0
    %161 = vmatprep.mubr.f32.mxu0 0.0
    %162 = vmatmul.mubr.f32.gmra.mrb[0].mxu0 %v56
    %v163 = vpop.f32.mrb[0].mxu0
    %v164 = vadd.f32 0.0, %v163
    %v165 = vpop.f32.mrb[0].mxu0
    %166 = vmatprep.mubr.f32.mxu0 0.0
    %167 = vmatmul.mubr.f32.gmra.mrb[0].mxu0 %v59
    %v168 = vpop.f32.mrb[0].mxu0
    %v169 = vadd.f32 0.0, %v168
    %v170 = vpop.f32.mrb[0].mxu0
    %171 = vdwg.mxu0
    %vm172 = vcmask 130048
    %v173 = vsel %vm172, %v134, -inf
    %v174 = vsel %vm172, %v139, -inf
    %v175 = vsel %vm172, %v144, -inf
    %v176 = vsel %vm172, %v149, -inf
    %v177 = vsel %vm172, %v154, -inf
    %v178 = vmax.f32 %v173, %v177
    %v179 = vsel %vm172, %v159, -inf
    %v180 = vmax.f32 %v174, %v179
    %v181 = vsel %vm172, %v164, -inf
    %v182 = vmax.f32 %v175, %v181
    %v183 = vsel %vm172, %v169, -inf
    %v184 = vmax.f32 %v176, %v183
    %v185 = vmax.f32 %v178, %v180
    %v186 = vmax.f32 %v182, %v184
    %v187 = vmax.f32 %v185, %v186
    %v188 = vrot.slane %v187, 4
    %v189 = vmax.f32 %v187, %v188
    %v190 = vrot.slane %v189, 2
    %v191 = vmax.f32 %v189, %v190
    %v192 = vrot.slane %v191, 1
    %v193 = vmax.f32 %v191, %v192
    %v194 = vlaneseq
    %v195 = vshrl.u32 %v194, 7
    %v196 = vadd.s32 %v195, 8
    %v197 = vadd.s32 %v195, 16
    %v198 = vadd.s32 %v195, 24
    %v199 = vadd.s32 %v195, 32
    %v200 = vadd.s32 %v195, 40
    %v201 = vadd.s32 %v195, 48
    %v202 = vadd.s32 %v195, 56
    %vm203 = vcmp.ge.f32.partialorder %v134, %v193
    %vm204 = vcmp.ge.f32.partialorder %v139, %v193
    %vm205 = vcmp.ge.f32.partialorder %v144, %v193
    %vm206 = vcmp.ge.f32.partialorder %v149, %v193
    %vm207 = vcmp.ge.f32.partialorder %v154, %v193
    %vm208 = vcmp.ge.f32.partialorder %v159, %v193
    %vm209 = vcmp.ge.f32.partialorder %v164, %v193
    %vm210 = vcmp.ge.f32.partialorder %v169, %v193
    %v211 = vsel %vm203, %v195, 64
    %v212 = vsel %vm204, %v196, 64
    %v213 = vsel %vm205, %v197, 64
    %v214 = vsel %vm206, %v198, 64
    %v215 = vsel %vm207, %v199, 64
    %v216 = vsel %vm208, %v200, 64
    %v217 = vsel %vm209, %v201, 64
    %v218 = vsel %vm210, %v202, 64
    %v219 = vsel %vm172, %v211, 2147483647
    %v220 = vsel %vm172, %v212, 2147483647
    %v221 = vsel %vm172, %v213, 2147483647
    %v222 = vsel %vm172, %v214, 2147483647
    %v223 = vsel %vm172, %v215, 2147483647
    %vm224 = vcmp.lt.s32.totalorder %v219, %v223
    %v225 = vsel %vm224, %v219, %v223
    %v226 = vsel %vm172, %v216, 2147483647
    %vm227 = vcmp.lt.s32.totalorder %v220, %v226
    %v228 = vsel %vm227, %v220, %v226
    %v229 = vsel %vm172, %v217, 2147483647
    %vm230 = vcmp.lt.s32.totalorder %v221, %v229
    %v231 = vsel %vm230, %v221, %v229
    %v232 = vsel %vm172, %v218, 2147483647
    %vm233 = vcmp.lt.s32.totalorder %v222, %v232
    %v234 = vsel %vm233, %v222, %v232
    %vm235 = vcmp.lt.s32.totalorder %v225, %v228
    %v236 = vsel %vm235, %v225, %v228
    %vm237 = vcmp.lt.s32.totalorder %v231, %v234
    %v238 = vsel %vm237, %v231, %v234
    %vm239 = vcmp.lt.s32.totalorder %v236, %v238
    %v240 = vsel %vm239, %v236, %v238
    %v241 = vrot.slane %v240, 4
    %vm242 = vcmp.lt.s32.totalorder %v240, %v241
    %v243 = vsel %vm242, %v240, %v241
    %v244 = vrot.slane %v243, 2
    %vm245 = vcmp.lt.s32.totalorder %v243, %v244
    %v246 = vsel %vm245, %v243, %v244
    %v247 = vrot.slane %v246, 1
    %vm248 = vcmp.lt.s32.totalorder %v246, %v247
    %v249 = vsel %vm248, %v246, %v247
    %vm250 = vcmask 122880
    %251 = vst.msk [vmem:[#allocation4] sm:$0x1] %vm250, %v249
    %vm252 = vcmp.eq.s32.totalorder %v195, %v249
    %vm253 = vcmp.eq.s32.totalorder %v196, %v249
    %vm254 = vcmp.eq.s32.totalorder %v197, %v249
    %vm255 = vcmp.eq.s32.totalorder %v198, %v249
    %vm256 = vcmp.eq.s32.totalorder %v199, %v249
    %vm257 = vcmp.eq.s32.totalorder %v200, %v249
    %vm258 = vcmp.eq.s32.totalorder %v201, %v249
    %vm259 = vcmp.eq.s32.totalorder %v202, %v249
    %v260 = vsel %vm252, 1, 0
    %v261 = vsel %vm253, 1, 0
    %v262 = vsel %vm254, 1, 0
    %v263 = vsel %vm255, 1, 0
    %v264 = vsel %vm256, 1, 0
    %v265 = vsel %vm257, 1, 0
    %v266 = vsel %vm258, 1, 0
    %v267 = vsel %vm259, 1, 0
    %v268 = vcvt.s32.f32 %v260
    %v269 = vcvt.s32.f32 %v261
    %v270 = vcvt.s32.f32 %v262
    %v271 = vcvt.s32.f32 %v263
    %v272 = vcvt.s32.f32 %v264
    %v273 = vcvt.s32.f32 %v265
    %v274 = vcvt.s32.f32 %v266
    %v275 = vcvt.s32.f32 %v267
    %276 = vxpose.xlu0.b32.start [1/16] %v268, 128
    %277 = vxpose.xlu0.b32.cont [2/16] %v269, 128
    %278 = vxpose.xlu0.b32.cont [3/16] %v270, 128
    %279 = vxpose.xlu0.b32.cont [4/16] %v271, 128
    %280 = vxpose.xlu0.b32.cont [5/16] %v272, 128
    %281 = vxpose.xlu0.b32.cont [6/16] %v273, 128
    %282 = vxpose.xlu0.b32.cont [7/16] %v274, 128
    %283 = vxpose.xlu0.b32.cont [8/16] %v275, 128
    %284 = vxpose.xlu0.b32.cont [9/16] 0.0, 128
    %285 = vxpose.xlu0.b32.cont [10/16] 0.0, 128
    %286 = vxpose.xlu0.b32.cont [11/16] 0.0, 128
    %287 = vxpose.xlu0.b32.cont [12/16] 0.0, 128
    %288 = vxpose.xlu0.b32.cont [13/16] 0.0, 128
    %289 = vxpose.xlu0.b32.cont [14/16] 0.0, 128
    %290 = vxpose.xlu0.b32.cont [15/16] 0.0, 128
    %291 = vxpose.xlu0.b32.end [16/16] 0.0, 128
    %v292 = vpop.trf.xlu0
    %v293 = vpop.trf.xlu0
    %v294 = vpop.trf.xlu0
    %v295 = vpop.trf.xlu0
    %v296 = vpop.trf.xlu0
    %v297 = vpop.trf.xlu0
    %v298 = vpop.trf.xlu0
    %v299 = vpop.trf.xlu0
    %v300 = vpop.trf.xlu0
    %v301 = vpop.trf.xlu0
    %v302 = vpop.trf.xlu0
    %v303 = vpop.trf.xlu0
    %v304 = vpop.trf.xlu0
    %v305 = vpop.trf.xlu0
    %v306 = vpop.trf.xlu0
    %v307 = vpop.trf.xlu0
    %vm308 = vcmask 523264
    %v310 = vsel %vm308, %v292, 0
    %v313 = vsel %vm308, %v293, 0
    %315 = vmatprep.subr.mxu0 0.0
    %316 = vmatpush1.msra.mxu0 %v28
    %317 = vmatprep.subr.mxu0 0.0
    %318 = vmatpush1.msra.mxu0 %v29
    %319 = vmatprep.subr.mxu0 0.0
    %320 = vmatpush1.msra.mxu0 %v30
    %321 = vmatprep.subr.mxu0 0.0
    %322 = vmatpush1.msra.mxu0 %v31
    %323 = vmatprep.subr.mxu0 0.0
    %324 = vmatpush1.msra.mxu0 %v32
    %325 = vmatprep.subr.mxu0 0.0
    %326 = vmatpush1.msra.mxu0 %v33
    %327 = vmatprep.subr.mxu0 0.0
    %328 = vmatpush1.msra.mxu0 %v34
    %329 = vmatprep.subr.mxu0 0.0
    %330 = vmatpush1.msra.mxu0 %v35
    %331 = vmatprep.subr.mxu0 0.0
    %332 = vmatpush1.msra.mxu0 0.0
    %333 = vmatprep.subr.mxu0 0.0
    %334 = vmatpush1.msra.mxu0 0.0
    %335 = vmatprep.subr.mxu0 0.0
    %336 = vmatpush1.msra.mxu0 0.0
    %337 = vmatprep.subr.mxu0 0.0
    %338 = vmatpush1.msra.mxu0 0.0
    %339 = vmatprep.subr.mxu0 0.0
    %340 = vmatpush1.msra.mxu0 0.0
    %341 = vmatprep.subr.mxu0 0.0
    %342 = vmatpush1.msra.mxu0 0.0
    %343 = vmatprep.subr.mxu0 0.0
    %344 = vmatpush1.msra.mxu0 0.0
    %345 = vmatprep.subr.mxu0 0.0
    %346 = vmatpush1.msra.mxu0 0.0
    %347 = vmatprep.subr.mxu0 0.0
    %348 = vmatpush1.msra.mxu0 0.0
    %349 = vmatprep.subr.mxu0 0.0
    %350 = vmatpush1.msra.mxu0 0.0
    %351 = vmatprep.subr.mxu0 0.0
    %352 = vmatpush1.msra.mxu0 0.0
    %353 = vmatprep.subr.mxu0 0.0
    %354 = vmatpush1.msra.mxu0 0.0
    %355 = vmatprep.subr.mxu0 0.0
    %356 = vmatpush1.msra.mxu0 0.0
    %357 = vmatprep.subr.mxu0 0.0
    %358 = vmatpush1.msra.mxu0 0.0
    %359 = vmatprep.subr.mxu0 0.0
    %360 = vmatpush1.msra.mxu0 0.0
    %361 = vmatprep.subr.mxu0 0.0
    %362 = vmatpush1.msra.mxu0 0.0
    %363 = vmatprep.subr.mxu0 0.0
    %364 = vmatpush1.msra.mxu0 0.0
    %365 = vmatprep.subr.mxu0 0.0
    %366 = vmatpush1.msra.mxu0 0.0
    %367 = vmatprep.subr.mxu0 0.0
    %368 = vmatpush1.msra.mxu0 0.0
    %369 = vmatprep.subr.mxu0 0.0
    %370 = vmatpush1.msra.mxu0 0.0
    %371 = vmatprep.subr.mxu0 0.0
    %372 = vmatpush1.msra.mxu0 0.0
    %373 = vmatprep.subr.mxu0 0.0
    %374 = vmatpush1.msra.mxu0 0.0
    %375 = vmatprep.subr.mxu0 0.0
    %376 = vmatpush1.msra.mxu0 0.0
    %377 = vmatprep.subr.mxu0 0.0
    %378 = vmatpush1.msra.mxu0 0.0
    %379 = vmatprep.mubr.f32.mxu0 0.0
    %380 = vmatmul.mubr.f32.gmra.mrb[0].mxu0 %v310
    %v381 = vpop.f32.mrb[0].mxu0
    %v382 = vadd.f32 0.0, %v381
    %v383 = vpop.f32.mrb[0].mxu0
    %384 = vmatprep.mubr.f32.mxu0 0.0
    %385 = vmatmul.mubr.f32.gmra.mrb[0].mxu0 %v313
    %v386 = vpop.f32.mrb[0].mxu0
    %v387 = vadd.f32 0.0, %v386
    %v388 = vpop.f32.mrb[0].mxu0
    %389 = vdwg.mxu0
    %v390 = vsub.f32 %v382, %v18
    %v391 = vsub.f32 %v387, %v19
    %v392 = vadd.f32 %v18, %v390
    %v393 = vadd.f32 %v19, %v391
    %394 = vst.msk [vmem:[#allocation2] sm:$0xff] %vm36, %v392
    %395 = vst.msk [vmem:[#allocation2 + $0x8] sm:$0xff] %vm36, %v393
    // Predicated region
    $region14: #{tpu_custom_call.1} parent=1 // pred_check
      _
    $region15: #{tpu_custom_call.1} parent=1 // pred_check_branch
      %397 = sbr.rel (0) target = $region17
    $region16: #{tpu_custom_call.1} parent=1 // pred_region
      %s399 = ssub.s32 256, 256
      %400 = vsyncadd [#allocation3], %s399
      %s401 = sshll.u32 [#allocation2], 4
      %s402 = int_to_ptr.vmem [resolvable:$true] %s401
      %407 = dma.vmem_to_hbm [thread:$0]  %s402, 256, %s3, [#allocation3], 128, 128, 8
    $region17: #{tpu_custom_call.1} parent=1 // pred_fallthru
      _
    // Predicated region
    $region18: #{tpu_custom_call.1} parent=1 // pred_check
      _
    $region19: #{tpu_custom_call.1} parent=1 // pred_check_branch
      %409 = sbr.rel (0) target = $region21
    $region20: #{tpu_custom_call.1} parent=1 // pred_region
      %s411 = ssub.s32 16, 16
      %412 = vsyncadd [#allocation5], %s411
      %s414 = sshll.u32 [#allocation4], 4
      %s415 = int_to_ptr.vmem [resolvable:$true] %s414
      %417 = dma.vmem_to_hbm [thread:$0]  %s415, 16, %s4, [#allocation5]
    $region21: #{tpu_custom_call.1} parent=1 // pred_fallthru
      _
    // Predicated region
    $region22: #{tpu_custom_call.1} parent=1 // pred_check
      _
    $region23: #{tpu_custom_call.1} parent=1 // pred_check_branch
      %419 = sbr.rel (0) target = $region25
    $region24: #{tpu_custom_call.1} parent=1 // pred_region
      %420 = dma.done [#allocation3], 256
    $region25: #{tpu_custom_call.1} parent=1 // pred_fallthru
      _
    // Predicated region
    $region26: #{tpu_custom_call.1} parent=1 // pred_check
      _
    $region27: #{tpu_custom_call.1} parent=1 // pred_check_branch
      %422 = sbr.rel (0) target = $region29
    $region28: #{tpu_custom_call.1} parent=1 // pred_region
      %423 = dma.done [#allocation5], 16
    $region29: #{tpu_custom_call.1} parent=1 // pred_fallthru
      _
    %424 = vsyncpa [#allocation3], 1
    %425 = vsyncpa [#allocation5], 1

</llo_original>
